<compile_context>
chip_gen: v7x
topology: tpu7x:2x2x1
jax: 0.10.0
libtpu: 0.0.40
codegen_flags: <defaults>
</compile_context>

<pallas_src>
import jax
import jax.numpy as jnp
from jax.experimental import pallas as pl
from jax.experimental.pallas import tpu as pltpu


def _copy_kernel(x_ref, o_ref):
    # Pure identity copy of one (tr, tl) tile: a single vld/vst stream,
    # no reshapes, no cross-lane work.
    o_ref[...] = x_ref[...]


def view_conv_reference(x: jax.Array) -> jax.Array:
    """What production code should do: a free metadata reshape."""
    B, C, L = x.shape
    return jnp.reshape(x, (B, C, 1, L))


def view_conv(x: jax.Array) -> jax.Array:
    """Pallas implementation of ViewConv.forward: (B, C, L) -> (B, C, 1, L)."""
    B, C, L = x.shape
    rows = B * C
    itemsize = x.dtype.itemsize

    # Flatten to a dense 2-D slab (free reshape: contiguous relabel only).
    x2 = jnp.reshape(x, (rows, L))

    # --- Tile selection -----------------------------------------------------
    # Sublane packing: 8 rows/vreg for 4-byte dtypes, 16 for 2-byte, 32 for 1B.
    sub = 8 * max(1, 4 // itemsize)
    if rows % sub == 0:
        tr = min(rows, 512)
        tr = max(sub, (tr // sub) * sub)          # multiple of sublane pack
    else:
        tr = rows                                 # full dim: always legal
    if L % 128 == 0:
        tl = min(L, 2048)
        tl = max(128, (tl // 128) * 128)          # multiple of lane width
    else:
        tl = L                                    # full dim: always legal

    grid = (pl.cdiv(rows, tr), pl.cdiv(L, tl))

    # Double-buffered input + output tiles, plus headroom; stays well under
    # the v7x scoped-VMEM ceiling for the default tile sizes (~2 MiB tiles).
    tile_bytes = tr * tl * itemsize
    vmem_limit = int(min(max(4 * tile_bytes + (1 << 20), 16 << 20), 96 << 20))

    out2 = pl.pallas_call(
        _copy_kernel,
        out_shape=jax.ShapeDtypeStruct((rows, L), x.dtype),
        grid=grid,
        in_specs=[pl.BlockSpec((tr, tl), lambda i, j: (i, j))],
        out_specs=pl.BlockSpec((tr, tl), lambda i, j: (i, j)),
        compiler_params=pltpu.CompilerParams(
            dimension_semantics=("parallel", "parallel"),
            vmem_limit_bytes=vmem_limit,
        ),
        cost_estimate=pl.CostEstimate(
            flops=0,
            transcendentals=0,
            bytes_accessed=2 * x.size * itemsize,
        ),
    )(x2)

    # Insert the singleton "height" axis outside the kernel: free metadata op,
    # keeps the kernel's stores lane/sublane dense.
    return jnp.reshape(out2, (B, C, 1, L))


if __name__ == "__main__":
    key = jax.random.PRNGKey(0)
    # Small shapes consistent with the module: batch=2, channels=4, seq=16.
    x = jax.random.normal(key, (2, 4, 16), dtype=jnp.float32)

    out = view_conv(x)
    jax.block_until_ready(out)

    ref = view_conv_reference(x)
    assert out.shape == (2, 4, 1, 16), out.shape
    assert out.dtype == x.dtype, out.dtype
    assert bool(jnp.array_equal(out, ref)), "mismatch vs. reference reshape"

    print("KERNEL_OK")
</pallas_src>

<mosaic_0001>
module attributes {stable_mosaic.version = 11 : i64} {
  func.func @_copy_kernel(%arg0: i32, %arg1: i32, %arg2: memref<8x16xf32, #tpu.memory_space<vmem>>, %arg3: memref<8x16xf32, #tpu.memory_space<vmem>>) attributes {dimension_semantics = [#tpu.dimension_semantics<parallel>, #tpu.dimension_semantics<parallel>], iteration_bounds = array<i64: 1, 1>, scalar_prefetch = 0 : i64, scratch_operands = 0 : i64, tpu.core_type = #tpu.core_type<tc>, window_params = [{transform_indices = @transform_0, window_bounds = array<i64: 8, 16>}, {transform_indices = @transform_1, window_bounds = array<i64: 8, 16>}]} {
    %c0 = arith.constant 0 : index
    %c0_0 = arith.constant 0 : index
    %0 = vector.load %arg2[%c0, %c0_0] : memref<8x16xf32, #tpu.memory_space<vmem>>, vector<8x16xf32>
    %c0_1 = arith.constant 0 : index
    %c0_2 = arith.constant 0 : index
    %1 = vector.load %arg3[%c0_1, %c0_2] : memref<8x16xf32, #tpu.memory_space<vmem>>, vector<8x16xf32>
    tpu.vector_store %arg3[%c0_1, %c0_2], %0 {strides = array<i32>} : memref<8x16xf32, #tpu.memory_space<vmem>>, vector<8x16xf32>,
    return
  }
  func.func @transform_0(%arg0: i32, %arg1: i32) -> (i32, i32) {
    %c0_i32 = arith.constant 0 : i32
    return %arg0, %arg1 : i32, i32
  }
  func.func @transform_1(%arg0: i32, %arg1: i32) -> (i32, i32) {
    %c0_i32 = arith.constant 0 : i32
    return %arg0, %arg1 : i32, i32
  }
}

</mosaic_0001>

<llo_original>
// kernel: tpu_custom_call.1
$region0: #{tpu_custom_call.1}
  #allocation0 [shape = 'u32[]', space=smem, size = 0x4, offset = 0x4, fixed_abs, tag = 'smem constant byte address 0x4 - core index']
  #allocation1 [shape = 'u32[144,128]{1,0:T(1,128)}', space=vmem, size = 0x12000, scoped, tag = 'internal scratch']
  %s0 = inlined_call_operand.hbm [shape: f32[8,16], index: 0, kind: input, shape index: {}]
  %s1 = inlined_call_operand.hbm [shape: f32[8,16], index: 1, kind: output, shape index: {}]
  %s2 = sld [smem:[#allocation0]]
  $region18: #{tpu_custom_call.1} parent=0
    _
  %s4 = ssub.s32 1, %s2
  %s5 = scalar_select 0, %s4, %s2
  $region1: #{tpu_custom_call.1} parent=0
    #allocation2 [shape = 'u8[4096]{0}', space=vmem, size = 0x1000, scoped, tag = 'input window, operand 0, single buffered']
    #allocation3 [shape = 's32[1]{0}', space=sflag, size = 0x4, scoped, tag = 'scoped memory for tpu_custom_call.1']
    #allocation4 [shape = 's32[1]{0}', space=sflag, size = 0x4, scoped, tag = 'scoped memory for tpu_custom_call.1']
    #allocation5 [shape = 'u8[4096]{0}', space=vmem, size = 0x1000, scoped, tag = 'output window, operand 0, single buffered']
    %6 = vsyncpa [#allocation3], 0
    %7 = vsyncpa [#allocation4], 0
    // Predicated region
    $region2: #{tpu_custom_call.1} parent=1 // pred_check
      _
    $region3: #{tpu_custom_call.1} parent=1 // pred_check_branch
      %9 = sbr.rel (0) target = $region5
    $region4: #{tpu_custom_call.1} parent=1 // pred_region
      %s11 = ssub.s32 128, 128
      %12 = vsyncadd [#allocation3], %s11
      %s14 = sshll.u32 [#allocation2], 4
      %s15 = int_to_ptr.vmem [resolvable:$true] %s14
      %17 = dma.hbm_to_vmem [thread:$0]  %s0, 128, %s15, [#allocation3]
    $region5: #{tpu_custom_call.1} parent=1 // pred_fallthru
      _
    // Predicated region
    $region6: #{tpu_custom_call.1} parent=1 // pred_check
      _
    $region7: #{tpu_custom_call.1} parent=1 // pred_check_branch
      %19 = sbr.rel (0) target = $region9
    $region8: #{tpu_custom_call.1} parent=1 // pred_region
      %20 = dma.done [#allocation3], 128
    $region9: #{tpu_custom_call.1} parent=1 // pred_fallthru
      _
    %v21 = vld [vmem:[#allocation2] sm:$0xff]
    %vm22 = vcmask 130048
    %23 = vst.msk [vmem:[#allocation5] sm:$0xff] %vm22, %v21
    // Predicated region
    $region10: #{tpu_custom_call.1} parent=1 // pred_check
      _
    $region11: #{tpu_custom_call.1} parent=1 // pred_check_branch
      %25 = sbr.rel (0) target = $region13
    $region12: #{tpu_custom_call.1} parent=1 // pred_region
      %s27 = ssub.s32 128, 128
      %28 = vsyncadd [#allocation4], %s27
      %s30 = sshll.u32 [#allocation5], 4
      %s31 = int_to_ptr.vmem [resolvable:$true] %s30
      %33 = dma.vmem_to_hbm [thread:$0]  %s31, 128, %s1, [#allocation4]
    $region13: #{tpu_custom_call.1} parent=1 // pred_fallthru
      _
    // Predicated region
    $region14: #{tpu_custom_call.1} parent=1 // pred_check
      _
    $region15: #{tpu_custom_call.1} parent=1 // pred_check_branch
      %35 = sbr.rel (0) target = $region17
    $region16: #{tpu_custom_call.1} parent=1 // pred_region
      %36 = dma.done [#allocation4], 128
    $region17: #{tpu_custom_call.1} parent=1 // pred_fallthru
      _
    %37 = vsyncpa [#allocation3], 1
    %38 = vsyncpa [#allocation4], 1

</llo_original>
